<compile_context>
chip_gen: v7x
topology: tpu7x:2x2x1
jax: 0.10.0
libtpu: 0.0.40
codegen_flags: <defaults>
</compile_context>

<pallas_src>
import functools

import jax
import jax.numpy as jnp
from jax.experimental import pallas as pl
from jax.experimental.pallas import tpu as pltpu


def _round_up(n, m):
    return ((n + m - 1) // m) * m


def actor_kernel(x_ref, w1_ref, b1_ref, w2_ref, b2_ref, w3_ref, b3_ref, o_ref):
    # fc1 + relu  (bf16 MXU operands, f32 accumulate; elementwise stays f32)
    x = x_ref[...]
    h1 = jnp.dot(x, w1_ref[...], preferred_element_type=jnp.float32) + b1_ref[...]
    h1 = jnp.maximum(h1, 0.0)
    # fc2 + relu
    h2 = jnp.dot(h1.astype(w2_ref.dtype), w2_ref[...],
                 preferred_element_type=jnp.float32) + b2_ref[...]
    h2 = jnp.maximum(h2, 0.0)
    # fc3 (padded logit lanes get bias -1e30 -> effectively -inf, so they
    # contribute exp(...) == 0 to the softmax below; no in-kernel masking).
    logits = jnp.dot(h2.astype(w3_ref.dtype), w3_ref[...],
                     preferred_element_type=jnp.float32) + b3_ref[...]
    # Numerically stable softmax over the feature (lane) axis == torch dim=1.
    m = jnp.max(logits, axis=1, keepdims=True)
    e = jnp.exp(logits - m)
    denom = jnp.sum(e, axis=1, keepdims=True)
    # approx reciprocal runs on the otherwise-idle EUP slot
    o_ref[...] = (e * pl.reciprocal(denom, approx=True)).astype(o_ref.dtype)


def actor_forward(x, params, *, block_batch=512, matmul_dtype=jnp.bfloat16):
    """x: (batch, input_dim) f32; params: (w1,b1,w2,b2,w3,b3) with
    w: (in_features, out_features), b: (out_features,)."""
    w1, b1, w2, b2, w3, b3 = params
    batch, in_dim = x.shape
    hidden = w1.shape[1]
    out_dim = w3.shape[1]

    pad_h = _round_up(hidden, 128)
    pad_o = _round_up(out_dim, 128)

    # Zero-pad feature dims to lane-friendly widths (exact math: padded weight
    # columns give 0 activations; padded logit lanes are killed by a -1e30
    # bias so they vanish under the in-kernel softmax).
    w1p = jnp.zeros((in_dim, pad_h), matmul_dtype).at[:, :hidden].set(w1.astype(matmul_dtype))
    b1p = jnp.zeros((1, pad_h), jnp.float32).at[:, :hidden].set(b1.reshape(1, -1))
    w2p = jnp.zeros((pad_h, pad_h), matmul_dtype).at[:hidden, :hidden].set(w2.astype(matmul_dtype))
    b2p = jnp.zeros((1, pad_h), jnp.float32).at[:, :hidden].set(b2.reshape(1, -1))
    w3p = jnp.zeros((pad_h, pad_o), matmul_dtype).at[:hidden, :out_dim].set(w3.astype(matmul_dtype))
    b3p = jnp.full((1, pad_o), -1e30, jnp.float32).at[:, :out_dim].set(b3.reshape(1, -1))

    # Batch tiling: pick a tile (multiple of 8), pad batch to a whole grid.
    tb = min(block_batch, _round_up(batch, 8))
    pad_b = _round_up(batch, tb)
    xp = jnp.zeros((pad_b, in_dim), matmul_dtype).at[:batch].set(x.astype(matmul_dtype))

    grid = (pad_b // tb,)
    const = lambda i: (0, 0)  # weights/biases: same block every step -> VMEM-resident

    flops = 2 * pad_b * (in_dim * pad_h + pad_h * pad_h + pad_h * pad_o)
    bytes_accessed = (
        xp.size * xp.dtype.itemsize
        + sum(a.size * a.dtype.itemsize for a in (w1p, b1p, w2p, b2p, w3p, b3p))
        + pad_b * pad_o * 4
    )

    out_padded = pl.pallas_call(
        functools.partial(actor_kernel),
        out_shape=jax.ShapeDtypeStruct((pad_b, pad_o), jnp.float32),
        grid=grid,
        in_specs=[
            pl.BlockSpec((tb, in_dim), lambda i: (i, 0)),   # x streamed per batch tile
            pl.BlockSpec((in_dim, pad_h), const),
            pl.BlockSpec((1, pad_h), const),
            pl.BlockSpec((pad_h, pad_h), const),
            pl.BlockSpec((1, pad_h), const),
            pl.BlockSpec((pad_h, pad_o), const),
            pl.BlockSpec((1, pad_o), const),
        ],
        out_specs=pl.BlockSpec((tb, pad_o), lambda i: (i, 0)),  # lane-dense store
        compiler_params=pltpu.CompilerParams(
            dimension_semantics=("parallel",)),
        cost_estimate=pl.CostEstimate(
            flops=flops,
            transcendentals=pad_b * pad_o,
            bytes_accessed=bytes_accessed),
    )(xp, w1p, b1p, w2p, b2p, w3p, b3p)

    return out_padded[:batch, :out_dim]


def init_actor_params(key, input_dim, output_dim, hidden_dim=24):
    """PyTorch-Linear-style init (U[-1/sqrt(fan_in), 1/sqrt(fan_in)]).
    Weights stored as (in_features, out_features), biases as (out_features,)."""
    def linear(key, fan_in, fan_out):
        kw, kb = jax.random.split(key)
        bound = 1.0 / jnp.sqrt(fan_in)
        w = jax.random.uniform(kw, (fan_in, fan_out), jnp.float32, -bound, bound)
        b = jax.random.uniform(kb, (fan_out,), jnp.float32, -bound, bound)
        return w, b

    k1, k2, k3 = jax.random.split(key, 3)
    w1, b1 = linear(k1, input_dim, hidden_dim)
    w2, b2 = linear(k2, hidden_dim, hidden_dim)
    w3, b3 = linear(k3, hidden_dim, output_dim)
    return (w1, b1, w2, b2, w3, b3)


def actor_reference(x, params, matmul_dtype=jnp.bfloat16):
    """Pure-JAX reference matching the kernel's numerics (bf16 matmul operands,
    f32 accumulation, exact softmax)."""
    w1, b1, w2, b2, w3, b3 = params

    def mm(a, w):
        return jnp.dot(a.astype(matmul_dtype), w.astype(matmul_dtype),
                       preferred_element_type=jnp.float32)

    h1 = jnp.maximum(mm(x, w1) + b1.reshape(1, -1), 0.0)
    h2 = jnp.maximum(mm(h1, w2) + b2.reshape(1, -1), 0.0)
    logits = mm(h2, w3) + b3.reshape(1, -1)
    return jax.nn.softmax(logits, axis=1)


if __name__ == "__main__":
    # CartPole-like shapes: batch=8, state dim=4, 2 actions, hidden=24.
    batch, input_dim, output_dim, hidden_dim = 8, 4, 2, 24

    key = jax.random.PRNGKey(0)
    kx, kp = jax.random.split(key)
    x = jax.random.normal(kx, (batch, input_dim), jnp.float32)
    params = init_actor_params(kp, input_dim, output_dim, hidden_dim)

    out = actor_forward(x, params)
    out = jax.block_until_ready(out)

    ref = actor_reference(x, params)
    assert out.shape == (batch, output_dim)
    # tolerance covers the approx (EUP) reciprocal in the softmax divide
    assert jnp.allclose(out, ref, atol=2e-3, rtol=2e-3), "mismatch vs reference"
    # rows of a softmax must sum to ~1
    assert jnp.allclose(jnp.sum(out, axis=1), 1.0, atol=2e-3)

    print("KERNEL_OK")
</pallas_src>

<mosaic_0001>
module attributes {stable_mosaic.version = 11 : i64} {
  func.func @actor_kernel(%arg0: i32, %arg1: memref<8x4xbf16, #tpu.memory_space<vmem>>, %arg2: memref<4x128xbf16, #tpu.memory_space<vmem>>, %arg3: memref<1x128xf32, #tpu.memory_space<vmem>>, %arg4: memref<128x128xbf16, #tpu.memory_space<vmem>>, %arg5: memref<1x128xf32, #tpu.memory_space<vmem>>, %arg6: memref<128x128xbf16, #tpu.memory_space<vmem>>, %arg7: memref<1x128xf32, #tpu.memory_space<vmem>>, %arg8: memref<8x128xf32, #tpu.memory_space<vmem>>) attributes {dimension_semantics = [#tpu.dimension_semantics<parallel>], iteration_bounds = array<i64: 1>, scalar_prefetch = 0 : i64, scratch_operands = 0 : i64, tpu.core_type = #tpu.core_type<tc>, window_params = [{transform_indices = @transform_0, window_bounds = array<i64: 8, 4>}, {pipeline_mode = #tpu.pipeline_mode<synchronous>, transform_indices = @transform_1, window_bounds = array<i64: 4, 128>}, {pipeline_mode = #tpu.pipeline_mode<synchronous>, transform_indices = @transform_2, window_bounds = array<i64: 1, 128>}, {pipeline_mode = #tpu.pipeline_mode<synchronous>, transform_indices = @transform_3, window_bounds = array<i64: 128, 128>}, {pipeline_mode = #tpu.pipeline_mode<synchronous>, transform_indices = @transform_4, window_bounds = array<i64: 1, 128>}, {pipeline_mode = #tpu.pipeline_mode<synchronous>, transform_indices = @transform_5, window_bounds = array<i64: 128, 128>}, {pipeline_mode = #tpu.pipeline_mode<synchronous>, transform_indices = @transform_6, window_bounds = array<i64: 1, 128>}, {transform_indices = @transform_7, window_bounds = array<i64: 8, 128>}]} {
    %c0 = arith.constant 0 : index
    %c0_0 = arith.constant 0 : index
    %0 = vector.load %arg1[%c0, %c0_0] : memref<8x4xbf16, #tpu.memory_space<vmem>>, vector<8x4xbf16>
    %c0_1 = arith.constant 0 : index
    %c0_2 = arith.constant 0 : index
    %1 = vector.load %arg2[%c0_1, %c0_2] : memref<4x128xbf16, #tpu.memory_space<vmem>>, vector<4x128xbf16>
    %cst = arith.constant dense<0.000000e+00> : vector<8x128xf32>
    %2 = tpu.matmul %0, %1, %cst {dimension_numbers = #tpu.dot_dimension_numbers<[1], [0], [0], [1], [0, 0, 1, 1], [], []>} : vector<8x4xbf16>, vector<4x128xbf16>, vector<8x128xf32> -> vector<8x128xf32>
    %c0_3 = arith.constant 0 : index
    %c0_4 = arith.constant 0 : index
    %3 = vector.load %arg3[%c0_3, %c0_4] : memref<1x128xf32, #tpu.memory_space<vmem>>, vector<1x128xf32>
    %4 = vector.broadcast %3 : vector<1x128xf32> to vector<8x128xf32>
    %5 = arith.addf %2, %4 : vector<8x128xf32>
    %cst_5 = arith.constant 0.000000e+00 : f32
    %6 = vector.broadcast %cst_5 : f32 to vector<8x128xf32>
    %7 = arith.maximumf %5, %6 : vector<8x128xf32>
    %8 = arith.truncf %7 : vector<8x128xf32> to vector<8x128xbf16>
    %c0_6 = arith.constant 0 : index
    %c0_7 = arith.constant 0 : index
    %9 = vector.load %arg4[%c0_6, %c0_7] : memref<128x128xbf16, #tpu.memory_space<vmem>>, vector<128x128xbf16>
    %cst_8 = arith.constant dense<0.000000e+00> : vector<8x128xf32>
    %10 = tpu.matmul %8, %9, %cst_8 {dimension_numbers = #tpu.dot_dimension_numbers<[1], [0], [0], [1], [0, 0, 1, 1], [], []>} : vector<8x128xbf16>, vector<128x128xbf16>, vector<8x128xf32> -> vector<8x128xf32>
    %c0_9 = arith.constant 0 : index
    %c0_10 = arith.constant 0 : index
    %11 = vector.load %arg5[%c0_9, %c0_10] : memref<1x128xf32, #tpu.memory_space<vmem>>, vector<1x128xf32>
    %12 = vector.broadcast %11 : vector<1x128xf32> to vector<8x128xf32>
    %13 = arith.addf %10, %12 : vector<8x128xf32>
    %cst_11 = arith.constant 0.000000e+00 : f32
    %14 = vector.broadcast %cst_11 : f32 to vector<8x128xf32>
    %15 = arith.maximumf %13, %14 : vector<8x128xf32>
    %16 = arith.truncf %15 : vector<8x128xf32> to vector<8x128xbf16>
    %c0_12 = arith.constant 0 : index
    %c0_13 = arith.constant 0 : index
    %17 = vector.load %arg6[%c0_12, %c0_13] : memref<128x128xbf16, #tpu.memory_space<vmem>>, vector<128x128xbf16>
    %cst_14 = arith.constant dense<0.000000e+00> : vector<8x128xf32>
    %18 = tpu.matmul %16, %17, %cst_14 {dimension_numbers = #tpu.dot_dimension_numbers<[1], [0], [0], [1], [0, 0, 1, 1], [], []>} : vector<8x128xbf16>, vector<128x128xbf16>, vector<8x128xf32> -> vector<8x128xf32>
    %c0_15 = arith.constant 0 : index
    %c0_16 = arith.constant 0 : index
    %19 = vector.load %arg7[%c0_15, %c0_16] : memref<1x128xf32, #tpu.memory_space<vmem>>, vector<1x128xf32>
    %20 = vector.broadcast %19 : vector<1x128xf32> to vector<8x128xf32>
    %21 = arith.addf %18, %20 : vector<8x128xf32>
    %cst_17 = arith.constant dense<0xFF800000> : vector<8xf32>
    %22 = vector.multi_reduction <maximumf>, %21, %cst_17 [1] : vector<8x128xf32> to vector<8xf32>
    %23 = vector.shape_cast %22 : vector<8xf32> to vector<8x1xf32>
    %24 = vector.broadcast %23 : vector<8x1xf32> to vector<8x128xf32>
    %25 = arith.subf %21, %24 : vector<8x128xf32>
    %26 = math.exp %25 : vector<8x128xf32>
    %cst_18 = arith.constant dense<0.000000e+00> : vector<8xf32>
    %27 = vector.multi_reduction <add>, %26, %cst_18 [1] : vector<8x128xf32> to vector<8xf32>
    %28 = vector.shape_cast %27 : vector<8xf32> to vector<8x1xf32>
    %29 = tpu.reciprocal %28 {approx = true} : vector<8x1xf32> -> vector<8x1xf32>
    %30 = vector.broadcast %29 : vector<8x1xf32> to vector<8x128xf32>
    %31 = arith.mulf %26, %30 : vector<8x128xf32>
    %c0_19 = arith.constant 0 : index
    %c0_20 = arith.constant 0 : index
    %32 = vector.load %arg8[%c0_19, %c0_20] : memref<8x128xf32, #tpu.memory_space<vmem>>, vector<8x128xf32>
    tpu.vector_store %arg8[%c0_19, %c0_20], %31 {strides = array<i32>} : memref<8x128xf32, #tpu.memory_space<vmem>>, vector<8x128xf32>,
    return
  }
  func.func @transform_0(%arg0: i32) -> (i32, i32) {
    %c0_i32 = arith.constant 0 : i32
    %c0_i32_0 = arith.constant 0 : i32
    return %arg0, %c0_i32 : i32, i32
  }
  func.func @transform_1(%arg0: i32) -> (i32, i32) {
    %c0_i32 = arith.constant 0 : i32
    %c0_i32_0 = arith.constant 0 : i32
    %c0_i32_1 = arith.constant 0 : i32
    return %c0_i32, %c0_i32_0 : i32, i32
  }
  func.func @transform_2(%arg0: i32) -> (i32, i32) {
    %c0_i32 = arith.constant 0 : i32
    %c0_i32_0 = arith.constant 0 : i32
    %c0_i32_1 = arith.constant 0 : i32
    return %c0_i32, %c0_i32_0 : i32, i32
  }
  func.func @transform_3(%arg0: i32) -> (i32, i32) {
    %c0_i32 = arith.constant 0 : i32
    %c0_i32_0 = arith.constant 0 : i32
    %c0_i32_1 = arith.constant 0 : i32
    return %c0_i32, %c0_i32_0 : i32, i32
  }
  func.func @transform_4(%arg0: i32) -> (i32, i32) {
    %c0_i32 = arith.constant 0 : i32
    %c0_i32_0 = arith.constant 0 : i32
    %c0_i32_1 = arith.constant 0 : i32
    return %c0_i32, %c0_i32_0 : i32, i32
  }
  func.func @transform_5(%arg0: i32) -> (i32, i32) {
    %c0_i32 = arith.constant 0 : i32
    %c0_i32_0 = arith.constant 0 : i32
    %c0_i32_1 = arith.constant 0 : i32
    return %c0_i32, %c0_i32_0 : i32, i32
  }
  func.func @transform_6(%arg0: i32) -> (i32, i32) {
    %c0_i32 = arith.constant 0 : i32
    %c0_i32_0 = arith.constant 0 : i32
    %c0_i32_1 = arith.constant 0 : i32
    return %c0_i32, %c0_i32_0 : i32, i32
  }
  func.func @transform_7(%arg0: i32) -> (i32, i32) {
    %c0_i32 = arith.constant 0 : i32
    %c0_i32_0 = arith.constant 0 : i32
    return %arg0, %c0_i32 : i32, i32
  }
}

</mosaic_0001>

<llo_original>
// kernel: tpu_custom_call.1
$region0: #{tpu_custom_call.1}
  #allocation0 [shape = 'u32[]', space=smem, size = 0x4, offset = 0x4, fixed_abs, tag = 'smem constant byte address 0x4 - core index']
  #allocation1 [shape = 'u32[144,128]{1,0:T(1,128)}', space=vmem, size = 0x12000, scoped, tag = 'internal scratch']
  %s0 = inlined_call_operand.vmem [shape: bf16[8,4], index: 0, kind: input, shape index: {}]
  %s1 = inlined_call_operand.vmem [shape: bf16[4,128], index: 1, kind: input, shape index: {}]
  %s2 = inlined_call_operand.vmem [shape: f32[1,128], index: 2, kind: input, shape index: {}]
  %s3 = inlined_call_operand.hbm [shape: bf16[128,128], index: 3, kind: input, shape index: {}]
  %s4 = inlined_call_operand.vmem [shape: f32[1,128], index: 4, kind: input, shape index: {}]
  %s5 = inlined_call_operand.hbm [shape: bf16[128,128], index: 5, kind: input, shape index: {}]
  %s6 = inlined_call_operand.vmem [shape: f32[1,128], index: 6, kind: input, shape index: {}]
  %s7 = inlined_call_operand.hbm [shape: f32[8,128], index: 7, kind: output, shape index: {}]
  %s8 = sld [smem:[#allocation0]]
  $region46: #{tpu_custom_call.1} parent=0
    _
  %s10 = ssub.s32 1, %s8
  %s11 = scalar_select 0, %s10, %s8
  $region1: #{tpu_custom_call.1} parent=0
    #allocation2 [shape = 'u8[32768]{0}', space=vmem, size = 0x8000, scoped, tag = 'input window, operand 3, single buffered']
    #allocation3 [shape = 's32[1]{0}', space=sflag, size = 0x4, scoped, tag = 'scoped memory for tpu_custom_call.1']
    #allocation4 [shape = 's32[1]{0}', space=sflag, size = 0x4, scoped, tag = 'scoped memory for tpu_custom_call.1']
    #allocation5 [shape = 'u8[32768]{0}', space=vmem, size = 0x8000, scoped, tag = 'input window, operand 5, single buffered']
    #allocation6 [shape = 's32[1]{0}', space=sflag, size = 0x4, scoped, tag = 'scoped memory for tpu_custom_call.1']
    #allocation7 [shape = 'u8[4096]{0}', space=vmem, size = 0x1000, scoped, tag = 'output window, operand 0, single buffered']
    %12 = vsyncpa [#allocation3], 0
    %13 = vsyncpa [#allocation6], 0
    %14 = vsyncpa [#allocation4], 0
    // Predicated region
    $region2: #{tpu_custom_call.1} parent=1 // pred_check
      _
    $region3: #{tpu_custom_call.1} parent=1 // pred_check_branch
      %16 = sbr.rel (0) target = $region5
    $region4: #{tpu_custom_call.1} parent=1 // pred_region
      _
    $region5: #{tpu_custom_call.1} parent=1 // pred_fallthru
      _
    // Predicated region
    $region6: #{tpu_custom_call.1} parent=1 // pred_check
      _
    $region7: #{tpu_custom_call.1} parent=1 // pred_check_branch
      %18 = sbr.rel (0) target = $region9
    $region8: #{tpu_custom_call.1} parent=1 // pred_region
      _
    $region9: #{tpu_custom_call.1} parent=1 // pred_fallthru
      _
    // Predicated region
    $region10: #{tpu_custom_call.1} parent=1 // pred_check
      _
    $region11: #{tpu_custom_call.1} parent=1 // pred_check_branch
      %20 = sbr.rel (0) target = $region13
    $region12: #{tpu_custom_call.1} parent=1 // pred_region
      _
    $region13: #{tpu_custom_call.1} parent=1 // pred_fallthru
      _
    // Predicated region
    $region14: #{tpu_custom_call.1} parent=1 // pred_check
      _
    $region15: #{tpu_custom_call.1} parent=1 // pred_check_branch
      %22 = sbr.rel (0) target = $region17
    $region16: #{tpu_custom_call.1} parent=1 // pred_region
      %s24 = ssub.s32 1024, 1024
      %25 = vsyncadd [#allocation3], %s24
      %s26 = sshll.u32 [#allocation2], 4
      %s27 = int_to_ptr.vmem [resolvable:$true] %s26
      %32 = dma.hbm_to_vmem [thread:$0]  %s3, 1024, %s27, [#allocation3], 64, 64, 4
    $region17: #{tpu_custom_call.1} parent=1 // pred_fallthru
      _
    // Predicated region
    $region18: #{tpu_custom_call.1} parent=1 // pred_check
      _
    $region19: #{tpu_custom_call.1} parent=1 // pred_check_branch
      %34 = sbr.rel (0) target = $region21
    $region20: #{tpu_custom_call.1} parent=1 // pred_region
      _
    $region21: #{tpu_custom_call.1} parent=1 // pred_fallthru
      _
    // Predicated region
    $region22: #{tpu_custom_call.1} parent=1 // pred_check
      _
    $region23: #{tpu_custom_call.1} parent=1 // pred_check_branch
      %36 = sbr.rel (0) target = $region25
    $region24: #{tpu_custom_call.1} parent=1 // pred_region
      %s38 = ssub.s32 1024, 1024
      %39 = vsyncadd [#allocation6], %s38
      %s40 = sshll.u32 [#allocation5], 4
      %s41 = int_to_ptr.vmem [resolvable:$true] %s40
      %46 = dma.hbm_to_vmem [thread:$0]  %s5, 1024, %s41, [#allocation6], 64, 64, 4
    $region25: #{tpu_custom_call.1} parent=1 // pred_fallthru
      _
    // Predicated region
    $region26: #{tpu_custom_call.1} parent=1 // pred_check
      _
    $region27: #{tpu_custom_call.1} parent=1 // pred_check_branch
      %48 = sbr.rel (0) target = $region29
    $region28: #{tpu_custom_call.1} parent=1 // pred_region
      _
    $region29: #{tpu_custom_call.1} parent=1 // pred_fallthru
      _
    // Predicated region
    $region30: #{tpu_custom_call.1} parent=1 // pred_check
      _
    $region31: #{tpu_custom_call.1} parent=1 // pred_check_branch
      %50 = sbr.rel (0) target = $region33
    $region32: #{tpu_custom_call.1} parent=1 // pred_region
      %51 = dma.done [#allocation3], 1024
    $region33: #{tpu_custom_call.1} parent=1 // pred_fallthru
      _
    // Predicated region
    $region34: #{tpu_custom_call.1} parent=1 // pred_check
      _
    $region35: #{tpu_custom_call.1} parent=1 // pred_check_branch
      %53 = sbr.rel (0) target = $region37
    $region36: #{tpu_custom_call.1} parent=1 // pred_region
      %54 = dma.done [#allocation6], 1024
    $region37: #{tpu_custom_call.1} parent=1 // pred_fallthru
      _
    %v56 = vld [vmem:[%s0] sm:$0xf]
    %v57 = vld [vmem:[%s1] sm:$0x3]
    %v58 = vld [vmem:[%s2] sm:$0x1]
    %v60 = vlaneseq
    %v61 = vshrl.u32 %v60, 7
    %v62 = vsub.s32 0, %v61
    %v63 = vrot.slane %v58, %v62
    %vm65 = vcmask 31744
    %v67 = vsel %vm65, %v56, 0
    %vm69 = vcmask 1041408
    %v71 = vsel %vm69, %v57, 0
    %73 = vmatprep.subr.bf16.mxu0 0
    %74 = vmatpush1.bf16.msra.mxu0 %v71
    %75 = vmatprep.subr.bf16.mxu0 0
    %76 = vmatpush1.bf16.msra.mxu0 0
    %77 = vmatprep.subr.bf16.mxu0 0
    %78 = vmatpush1.bf16.msra.mxu0 0
    %79 = vmatprep.subr.bf16.mxu0 0
    %80 = vmatpush1.bf16.msra.mxu0 0
    %81 = vmatprep.subr.bf16.mxu0 0
    %82 = vmatpush1.bf16.msra.mxu0 0
    %83 = vmatprep.subr.bf16.mxu0 0
    %84 = vmatpush1.bf16.msra.mxu0 0
    %85 = vmatprep.subr.bf16.mxu0 0
    %86 = vmatpush1.bf16.msra.mxu0 0
    %87 = vmatprep.subr.bf16.mxu0 0
    %88 = vmatpush1.bf16.msra.mxu0 0
    %89 = vmatprep.subr.bf16.mxu0 0
    %90 = vmatpush1.bf16.msra.mxu0 0
    %91 = vmatprep.subr.bf16.mxu0 0
    %92 = vmatpush1.bf16.msra.mxu0 0
    %93 = vmatprep.subr.bf16.mxu0 0
    %94 = vmatpush1.bf16.msra.mxu0 0
    %95 = vmatprep.subr.bf16.mxu0 0
    %96 = vmatpush1.bf16.msra.mxu0 0
    %97 = vmatprep.subr.bf16.mxu0 0
    %98 = vmatpush1.bf16.msra.mxu0 0
    %99 = vmatprep.subr.bf16.mxu0 0
    %100 = vmatpush1.bf16.msra.mxu0 0
    %101 = vmatprep.subr.bf16.mxu0 0
    %102 = vmatpush1.bf16.msra.mxu0 0
    %103 = vmatprep.subr.bf16.mxu0 0
    %104 = vmatpush1.bf16.msra.mxu0 0
    %105 = vmatprep.mubr.bf16.mxu0 0
    %106 = vmatmul.mubr.bf16.gmra.mrb[0].mxu0 %v67
    %v107 = vpop.f32.mrb[0].mxu0
    %v108 = vadd.f32 %v63, %v107
    %v109 = vpop.f32.mrb[0].mxu0
    %v110 = vpop.f32.mrb[0].mxu0
    %v111 = vpop.f32.mrb[0].mxu0
    %112 = vdwg.mxu0
    %v113 = vmax.f32 %v108, 0.0
    %v114 = vpack.c.bf16 %v113, %v113
    %v115 = vld [vmem:[#allocation2] sm:$0xf]
    %v116 = vld [vmem:[#allocation2 + $0x4] sm:$0xf]
    %v117 = vld [vmem:[#allocation2 + $0x8] sm:$0xf]
    %v118 = vld [vmem:[#allocation2 + $0xc] sm:$0xf]
    %v119 = vld [vmem:[#allocation2 + $0x10] sm:$0xf]
    %v120 = vld [vmem:[#allocation2 + $0x14] sm:$0xf]
    %v121 = vld [vmem:[#allocation2 + $0x18] sm:$0xf]
    %v122 = vld [vmem:[#allocation2 + $0x1c] sm:$0xf]
    %v123 = vld [vmem:[#allocation2 + $0x20] sm:$0xf]
    %v124 = vld [vmem:[#allocation2 + $0x24] sm:$0xf]
    %v125 = vld [vmem:[#allocation2 + $0x28] sm:$0xf]
    %v126 = vld [vmem:[#allocation2 + $0x2c] sm:$0xf]
    %v127 = vld [vmem:[#allocation2 + $0x30] sm:$0xf]
    %v128 = vld [vmem:[#allocation2 + $0x34] sm:$0xf]
    %v129 = vld [vmem:[#allocation2 + $0x38] sm:$0xf]
    %v130 = vld [vmem:[#allocation2 + $0x3c] sm:$0xf]
    %v131 = vld [vmem:[%s4] sm:$0x1]
    %v133 = vlaneseq
    %v134 = vshrl.u32 %v133, 7
    %v135 = vsub.s32 0, %v134
    %v136 = vrot.slane %v131, %v135
    %v154 = vunpack.c.l.b16 %v115
    %v155 = vunpack.c.l.b16 %v116
    %v156 = vunpack.c.l.b16 %v117
    %v157 = vunpack.c.l.b16 %v118
    %v158 = vunpack.c.l.b16 %v119
    %v159 = vunpack.c.l.b16 %v120
    %v160 = vunpack.c.l.b16 %v121
    %v161 = vunpack.c.l.b16 %v122
    %v162 = vunpack.c.l.b16 %v123
    %v163 = vunpack.c.l.b16 %v124
    %v164 = vunpack.c.l.b16 %v125
    %v165 = vunpack.c.l.b16 %v126
    %v166 = vunpack.c.l.b16 %v127
    %v167 = vunpack.c.l.b16 %v128
    %v168 = vunpack.c.l.b16 %v129
    %v169 = vunpack.c.l.b16 %v130
    %v170 = vpack.c.b16 %v155, %v154
    %v171 = vpack.c.b16 %v157, %v156
    %v172 = vpack.c.b16 %v159, %v158
    %v173 = vpack.c.b16 %v161, %v160
    %v174 = vpack.c.b16 %v163, %v162
    %v175 = vpack.c.b16 %v165, %v164
    %v176 = vpack.c.b16 %v167, %v166
    %v177 = vpack.c.b16 %v169, %v168
    %186 = vmatprep.subr.bf16.mxu0 0
    %187 = vmatpush1.bf16.msra.mxu0 %v170
    %188 = vmatprep.subr.bf16.mxu0 0
    %189 = vmatpush1.bf16.msra.mxu0 %v171
    %190 = vmatprep.subr.bf16.mxu0 0
    %191 = vmatpush1.bf16.msra.mxu0 %v172
    %192 = vmatprep.subr.bf16.mxu0 0
    %193 = vmatpush1.bf16.msra.mxu0 %v173
    %194 = vmatprep.subr.bf16.mxu0 0
    %195 = vmatpush1.bf16.msra.mxu0 %v174
    %196 = vmatprep.subr.bf16.mxu0 0
    %197 = vmatpush1.bf16.msra.mxu0 %v175
    %198 = vmatprep.subr.bf16.mxu0 0
    %199 = vmatpush1.bf16.msra.mxu0 %v176
    %200 = vmatprep.subr.bf16.mxu0 0
    %201 = vmatpush1.bf16.msra.mxu0 %v177
    %202 = vmatprep.subr.bf16.mxu0 0
    %203 = vmatpush1.bf16.msra.mxu0 0
    %204 = vmatprep.subr.bf16.mxu0 0
    %205 = vmatpush1.bf16.msra.mxu0 0
    %206 = vmatprep.subr.bf16.mxu0 0
    %207 = vmatpush1.bf16.msra.mxu0 0
    %208 = vmatprep.subr.bf16.mxu0 0
    %209 = vmatpush1.bf16.msra.mxu0 0
    %210 = vmatprep.subr.bf16.mxu0 0
    %211 = vmatpush1.bf16.msra.mxu0 0
    %212 = vmatprep.subr.bf16.mxu0 0
    %213 = vmatpush1.bf16.msra.mxu0 0
    %214 = vmatprep.subr.bf16.mxu0 0
    %215 = vmatpush1.bf16.msra.mxu0 0
    %216 = vmatprep.subr.bf16.mxu0 0
    %217 = vmatpush1.bf16.msra.mxu0 0
    %218 = vmatprep.mubr.bf16.mxu0 0
    %219 = vmatmul.mubr.bf16.gmra.mrb[0].mxu0 %v114
    %v220 = vpop.f32.mrb[0].mxu0
    %v221 = vadd.f32 %v136, %v220
    %v222 = vpop.f32.mrb[0].mxu0
    %v223 = vpop.f32.mrb[0].mxu0
    %v224 = vpop.f32.mrb[0].mxu0
    %225 = vdwg.mxu0
    %v226 = vmax.f32 %v221, 0.0
    %v227 = vpack.c.bf16 %v226, %v226
    %v228 = vld [vmem:[#allocation5] sm:$0xf]
    %v229 = vld [vmem:[#allocation5 + $0x4] sm:$0xf]
    %v230 = vld [vmem:[#allocation5 + $0x8] sm:$0xf]
    %v231 = vld [vmem:[#allocation5 + $0xc] sm:$0xf]
    %v232 = vld [vmem:[#allocation5 + $0x10] sm:$0xf]
    %v233 = vld [vmem:[#allocation5 + $0x14] sm:$0xf]
    %v234 = vld [vmem:[#allocation5 + $0x18] sm:$0xf]
    %v235 = vld [vmem:[#allocation5 + $0x1c] sm:$0xf]
    %v236 = vld [vmem:[#allocation5 + $0x20] sm:$0xf]
    %v237 = vld [vmem:[#allocation5 + $0x24] sm:$0xf]
    %v238 = vld [vmem:[#allocation5 + $0x28] sm:$0xf]
    %v239 = vld [vmem:[#allocation5 + $0x2c] sm:$0xf]
    %v240 = vld [vmem:[#allocation5 + $0x30] sm:$0xf]
    %v241 = vld [vmem:[#allocation5 + $0x34] sm:$0xf]
    %v242 = vld [vmem:[#allocation5 + $0x38] sm:$0xf]
    %v243 = vld [vmem:[#allocation5 + $0x3c] sm:$0xf]
    %v244 = vld [vmem:[%s6] sm:$0x1]
    %v246 = vlaneseq
    %v247 = vshrl.u32 %v246, 7
    %v248 = vsub.s32 0, %v247
    %v249 = vrot.slane %v244, %v248
    %v267 = vunpack.c.l.b16 %v228
    %v268 = vunpack.c.l.b16 %v229
    %v269 = vunpack.c.l.b16 %v230
    %v270 = vunpack.c.l.b16 %v231
    %v271 = vunpack.c.l.b16 %v232
    %v272 = vunpack.c.l.b16 %v233
    %v273 = vunpack.c.l.b16 %v234
    %v274 = vunpack.c.l.b16 %v235
    %v275 = vunpack.c.l.b16 %v236
    %v276 = vunpack.c.l.b16 %v237
    %v277 = vunpack.c.l.b16 %v238
    %v278 = vunpack.c.l.b16 %v239
    %v279 = vunpack.c.l.b16 %v240
    %v280 = vunpack.c.l.b16 %v241
    %v281 = vunpack.c.l.b16 %v242
    %v282 = vunpack.c.l.b16 %v243
    %v283 = vpack.c.b16 %v268, %v267
    %v284 = vpack.c.b16 %v270, %v269
    %v285 = vpack.c.b16 %v272, %v271
    %v286 = vpack.c.b16 %v274, %v273
    %v287 = vpack.c.b16 %v276, %v275
    %v288 = vpack.c.b16 %v278, %v277
    %v289 = vpack.c.b16 %v280, %v279
    %v290 = vpack.c.b16 %v282, %v281
    %299 = vmatprep.subr.bf16.mxu0 0
    %300 = vmatpush1.bf16.msra.mxu0 %v283
    %301 = vmatprep.subr.bf16.mxu0 0
    %302 = vmatpush1.bf16.msra.mxu0 %v284
    %303 = vmatprep.subr.bf16.mxu0 0
    %304 = vmatpush1.bf16.msra.mxu0 %v285
    %305 = vmatprep.subr.bf16.mxu0 0
    %306 = vmatpush1.bf16.msra.mxu0 %v286
    %307 = vmatprep.subr.bf16.mxu0 0
    %308 = vmatpush1.bf16.msra.mxu0 %v287
    %309 = vmatprep.subr.bf16.mxu0 0
    %310 = vmatpush1.bf16.msra.mxu0 %v288
    %311 = vmatprep.subr.bf16.mxu0 0
    %312 = vmatpush1.bf16.msra.mxu0 %v289
    %313 = vmatprep.subr.bf16.mxu0 0
    %314 = vmatpush1.bf16.msra.mxu0 %v290
    %315 = vmatprep.subr.bf16.mxu0 0
    %316 = vmatpush1.bf16.msra.mxu0 0
    %317 = vmatprep.subr.bf16.mxu0 0
    %318 = vmatpush1.bf16.msra.mxu0 0
    %319 = vmatprep.subr.bf16.mxu0 0
    %320 = vmatpush1.bf16.msra.mxu0 0
    %321 = vmatprep.subr.bf16.mxu0 0
    %322 = vmatpush1.bf16.msra.mxu0 0
    %323 = vmatprep.subr.bf16.mxu0 0
    %324 = vmatpush1.bf16.msra.mxu0 0
    %325 = vmatprep.subr.bf16.mxu0 0
    %326 = vmatpush1.bf16.msra.mxu0 0
    %327 = vmatprep.subr.bf16.mxu0 0
    %328 = vmatpush1.bf16.msra.mxu0 0
    %329 = vmatprep.subr.bf16.mxu0 0
    %330 = vmatpush1.bf16.msra.mxu0 0
    %331 = vmatprep.mubr.bf16.mxu0 0
    %332 = vmatmul.mubr.bf16.gmra.mrb[0].mxu0 %v227
    %v333 = vpop.f32.mrb[0].mxu0
    %v334 = vadd.f32 %v249, %v333
    %v335 = vpop.f32.mrb[0].mxu0
    %v336 = vpop.f32.mrb[0].mxu0
    %v337 = vpop.f32.mrb[0].mxu0
    %338 = vdwg.mxu0
    %339 = vmax.xlane.f32.xlu0 %v334
    %v340 = vpop.xlane.xlu0 %339
    %v341 = vsub.f32 %v334, %v340
    %v342 = vmul.f32 %v341, 1.442695
    %v343 = vpow.pop %v342
    %344 = vadd.xlane.f32.xlu0 %v343
    %v345 = vpop.xlane.xlu0 %344
    %v346 = vrcp.pop %v345
    %v347 = vmul.f32 %v343, %v346
    %348 = vst [vmem:[#allocation7] sm:$0xff] %v347
    // Predicated region
    $region38: #{tpu_custom_call.1} parent=1 // pred_check
      _
    $region39: #{tpu_custom_call.1} parent=1 // pred_check_branch
      %350 = sbr.rel (0) target = $region41
    $region40: #{tpu_custom_call.1} parent=1 // pred_region
      %s352 = ssub.s32 128, 128
      %353 = vsyncadd [#allocation4], %s352
      %s355 = sshll.u32 [#allocation7], 4
      %s356 = int_to_ptr.vmem [resolvable:$true] %s355
      %358 = dma.vmem_to_hbm [thread:$0]  %s356, 128, %s7, [#allocation4]
    $region41: #{tpu_custom_call.1} parent=1 // pred_fallthru
      _
    // Predicated region
    $region42: #{tpu_custom_call.1} parent=1 // pred_check
      _
    $region43: #{tpu_custom_call.1} parent=1 // pred_check_branch
      %360 = sbr.rel (0) target = $region45
    $region44: #{tpu_custom_call.1} parent=1 // pred_region
      %361 = dma.done [#allocation4], 128
    $region45: #{tpu_custom_call.1} parent=1 // pred_fallthru
      _
    %362 = vsyncpa [#allocation3], 1
    %363 = vsyncpa [#allocation6], 1
    %364 = vsyncpa [#allocation4], 1

</llo_original>
